<compile_context>
chip_gen: v7x
topology: tpu7x:2x2x1
jax: 0.10.0
libtpu: 0.0.40
codegen_flags: <defaults>
</compile_context>

<pallas_src>
import math

import jax
import jax.numpy as jnp
from jax.experimental import pallas as pl
from jax.experimental.pallas import tpu as pltpu


def _round_up(n, m):
    return ((n + m - 1) // m) * m


def _choose_batch_tile(B, max_tile=2048):
    """Lane-dense batch tile.  Single block for small B, otherwise a multiple
    of 256 that guarantees >= 2 grid steps (both v7x TensorCores)."""
    if B <= 256:
        return B                       # one block; last dim == full array dim
    half = -(-B // 2)                  # cdiv(B, 2)
    return min(max_tile, _round_up(half, 256))


# ----------------------------- Pallas kernel -------------------------------

def _fls_kernel(src_ref, w1_ref, b1_ref, w2_ref, b2_ref, w3_ref, b3_ref,
                out_ref):
    # Layer 1: (hidden, in) @ (in, tile) + b1 column, then sin (f32 on EUP).
    h = jnp.dot(w1_ref[...], src_ref[...], preferred_element_type=jnp.float32)
    h = jnp.sin(h + b1_ref[...])

    # Layer 2: Linear + softplus (torch defaults: beta=1, threshold=20).
    z = jnp.dot(w2_ref[...], h.astype(w2_ref.dtype),
                preferred_element_type=jnp.float32) + b2_ref[...]
    h2 = jnp.where(z > 20.0, z, jnp.log1p(jnp.exp(jnp.minimum(z, 20.0))))

    # Layer 3: final Linear; lane-dense (out_dim, tile) store.
    out = jnp.dot(w3_ref[...], h2.astype(w3_ref.dtype),
                  preferred_element_type=jnp.float32) + b3_ref[...]
    out_ref[...] = out.astype(out_ref.dtype)


def fls_forward(x, t, params, *, max_batch_tile=2048):
    """FLS forward pass.  x: (B, dx) f32, t: (B, dt) f32 -> (B, out_dim) f32."""
    (w1, b1), (w2, b2), (w3, b3) = params
    B = x.shape[0]
    in_dim = x.shape[1] + t.shape[1]
    hidden_dim = w1.shape[1]
    out_dim = w3.shape[1]

    # Lane-dense orientation: batch on the last (lane) axis.  The concat is
    # absorbed into the same transpose copy, and the matmul operands are cast
    # to bf16 (f32 accumulation stays inside the kernel).
    src_t = jnp.concatenate([x, t], axis=-1).T.astype(jnp.bfloat16)  # (in, B)

    w1t = w1.T.astype(jnp.bfloat16)                    # (hidden, in)
    w2t = w2.T.astype(jnp.bfloat16)                    # (hidden, hidden)
    w3t = w3.T.astype(jnp.bfloat16)                    # (out,    hidden)
    b1c = b1.reshape(hidden_dim, 1).astype(jnp.float32)
    b2c = b2.reshape(hidden_dim, 1).astype(jnp.float32)
    b3c = b3.reshape(out_dim, 1).astype(jnp.float32)

    tile = _choose_batch_tile(B, max_batch_tile)
    grid = (pl.cdiv(B, tile),)

    const = lambda shape: pl.BlockSpec(shape, lambda i: (0, 0))

    # Advisory scheduling hint for XLA.
    flops = 2 * B * (in_dim * hidden_dim + hidden_dim * hidden_dim
                     + hidden_dim * out_dim)
    transcendentals = 3 * B * hidden_dim               # sin + exp + log1p
    bytes_accessed = (2 * B * in_dim                    # bf16 src^T
                      + 4 * B * out_dim                 # f32 out^T
                      + 2 * (in_dim * hidden_dim + hidden_dim * hidden_dim
                             + hidden_dim * out_dim)    # bf16 weights
                      + 4 * (2 * hidden_dim + out_dim)) # f32 biases
    cost = pl.CostEstimate(flops=flops, transcendentals=transcendentals,
                           bytes_accessed=bytes_accessed)

    out_t = pl.pallas_call(
        _fls_kernel,
        out_shape=jax.ShapeDtypeStruct((out_dim, B), jnp.float32),
        grid_spec=pltpu.PrefetchScalarGridSpec(
            num_scalar_prefetch=0,
            grid=grid,
            in_specs=[
                pl.BlockSpec((in_dim, tile), lambda i: (0, i)),  # src^T
                const((hidden_dim, in_dim)),                     # W1^T
                const((hidden_dim, 1)),                          # b1
                const((hidden_dim, hidden_dim)),                 # W2^T
                const((hidden_dim, 1)),                          # b2
                const((out_dim, hidden_dim)),                    # W3^T
                const((out_dim, 1)),                             # b3
            ],
            out_specs=pl.BlockSpec((out_dim, tile), lambda i: (0, i)),
        ),
        compiler_params=pltpu.CompilerParams(
            dimension_semantics=("parallel",)),
        cost_estimate=cost,
    )(src_t, w1t, b1c, w2t, b2c, w3t, b3c)

    # Back to the PyTorch module's (B, out_dim) orientation.
    return out_t.T


# -------------------------- deterministic init ------------------------------

def init_fls_params(key, in_dim, hidden_dim, out_dim, num_layer):
    """PyTorch-style uniform(-1/sqrt(fan_in), 1/sqrt(fan_in)) init."""
    assert num_layer == 3  # TODO(synk): generalize fused kernel to arbitrary depth
    dims = [(in_dim, hidden_dim), (hidden_dim, hidden_dim),
            (hidden_dim, out_dim)]
    params = []
    for (fan_in, fan_out) in dims:
        key, kw, kb = jax.random.split(key, 3)
        bound = 1.0 / math.sqrt(fan_in)
        w = jax.random.uniform(kw, (fan_in, fan_out), jnp.float32,
                               minval=-bound, maxval=bound)
        b = jax.random.uniform(kb, (fan_out,), jnp.float32,
                               minval=-bound, maxval=bound)
        params.append((w, b))
    return params


def fls_reference(x, t, params, *, operand_dtype=jnp.float32):
    """Pure-JAX reference.  operand_dtype=bf16 mirrors the kernel's precision."""
    (w1, b1), (w2, b2), (w3, b3) = params
    src = jnp.concatenate([x, t], axis=-1).astype(operand_dtype)
    h = jnp.dot(src, w1.astype(operand_dtype),
                preferred_element_type=jnp.float32) + b1
    h = jnp.sin(h)
    z = jnp.dot(h.astype(operand_dtype), w2.astype(operand_dtype),
                preferred_element_type=jnp.float32) + b2
    h = jnp.where(z > 20.0, z, jnp.log1p(jnp.exp(jnp.minimum(z, 20.0))))
    return jnp.dot(h.astype(operand_dtype), w3.astype(operand_dtype),
                   preferred_element_type=jnp.float32) + b3


# --------------------------------- main -------------------------------------

if __name__ == "__main__":
    key = jax.random.PRNGKey(0)

    x_dim, t_dim = 24, 8          # concatenated -> in_dim = 32
    in_dim = x_dim + t_dim
    hidden_dim = 32
    out_dim = 8
    num_layer = 3

    key, kp = jax.random.split(key)
    params = init_fls_params(kp, in_dim, hidden_dim, out_dim, num_layer)

    # Small case (B=8: single full-extent block) and a larger non-tile-multiple
    # case (B=1000: two grid steps, masked boundary block).
    for batch in (8, 1000):
        key, kx, kt = jax.random.split(key, 3)
        x = jax.random.normal(kx, (batch, x_dim), jnp.float32)
        t = jax.random.normal(kt, (batch, t_dim), jnp.float32)

        out = jax.block_until_ready(fls_forward(x, t, params))
        assert out.shape == (batch, out_dim)

        # Tight check against a reference using the same bf16-operand /
        # f32-accumulation precision path.
        ref_bf16 = fls_reference(x, t, params, operand_dtype=jnp.bfloat16)
        assert jnp.allclose(out, ref_bf16, atol=2e-3, rtol=2e-3)

        # Loose semantic check against the full-f32 reference (matches the
        # original torch module's math up to bf16 operand rounding).
        ref_f32 = fls_reference(x, t, params, operand_dtype=jnp.float32)
        assert jnp.allclose(out, ref_f32, atol=1e-1, rtol=1e-1)

    print("KERNEL_OK")
</pallas_src>

<mosaic_0001>
module attributes {stable_mosaic.version = 11 : i64} {
  func.func @_fls_kernel(%arg0: i32, %arg1: memref<32x8xbf16, #tpu.memory_space<vmem>>, %arg2: memref<32x32xbf16, #tpu.memory_space<vmem>>, %arg3: memref<32x1xf32, #tpu.memory_space<vmem>>, %arg4: memref<32x32xbf16, #tpu.memory_space<vmem>>, %arg5: memref<32x1xf32, #tpu.memory_space<vmem>>, %arg6: memref<8x32xbf16, #tpu.memory_space<vmem>>, %arg7: memref<8x1xf32, #tpu.memory_space<vmem>>, %arg8: memref<8x8xf32, #tpu.memory_space<vmem>>) attributes {dimension_semantics = [#tpu.dimension_semantics<parallel>], iteration_bounds = array<i64: 1>, scalar_prefetch = 0 : i64, scratch_operands = 0 : i64, tpu.core_type = #tpu.core_type<tc>, window_params = [{transform_indices = @transform_0, window_bounds = array<i64: 32, 8>}, {pipeline_mode = #tpu.pipeline_mode<synchronous>, transform_indices = @transform_1, window_bounds = array<i64: 32, 32>}, {pipeline_mode = #tpu.pipeline_mode<synchronous>, transform_indices = @transform_2, window_bounds = array<i64: 32, 1>}, {pipeline_mode = #tpu.pipeline_mode<synchronous>, transform_indices = @transform_3, window_bounds = array<i64: 32, 32>}, {pipeline_mode = #tpu.pipeline_mode<synchronous>, transform_indices = @transform_4, window_bounds = array<i64: 32, 1>}, {pipeline_mode = #tpu.pipeline_mode<synchronous>, transform_indices = @transform_5, window_bounds = array<i64: 8, 32>}, {pipeline_mode = #tpu.pipeline_mode<synchronous>, transform_indices = @transform_6, window_bounds = array<i64: 8, 1>}, {transform_indices = @transform_7, window_bounds = array<i64: 8, 8>}]} {
    %c0 = arith.constant 0 : index
    %c0_0 = arith.constant 0 : index
    %0 = vector.load %arg2[%c0, %c0_0] : memref<32x32xbf16, #tpu.memory_space<vmem>>, vector<32x32xbf16>
    %c0_1 = arith.constant 0 : index
    %c0_2 = arith.constant 0 : index
    %1 = vector.load %arg1[%c0_1, %c0_2] : memref<32x8xbf16, #tpu.memory_space<vmem>>, vector<32x8xbf16>
    %cst = arith.constant dense<0.000000e+00> : vector<32x8xf32>
    %2 = tpu.matmul %0, %1, %cst {dimension_numbers = #tpu.dot_dimension_numbers<[1], [0], [0], [1], [0, 0, 1, 1], [], []>} : vector<32x32xbf16>, vector<32x8xbf16>, vector<32x8xf32> -> vector<32x8xf32>
    %c0_3 = arith.constant 0 : index
    %c0_4 = arith.constant 0 : index
    %3 = vector.load %arg3[%c0_3, %c0_4] : memref<32x1xf32, #tpu.memory_space<vmem>>, vector<32x1xf32>
    %4 = vector.broadcast %3 : vector<32x1xf32> to vector<32x8xf32>
    %5 = arith.addf %2, %4 : vector<32x8xf32>
    %6 = math.sin %5 : vector<32x8xf32>
    %c0_5 = arith.constant 0 : index
    %c0_6 = arith.constant 0 : index
    %7 = vector.load %arg4[%c0_5, %c0_6] : memref<32x32xbf16, #tpu.memory_space<vmem>>, vector<32x32xbf16>
    %8 = arith.truncf %6 : vector<32x8xf32> to vector<32x8xbf16>
    %cst_7 = arith.constant dense<0.000000e+00> : vector<32x8xf32>
    %9 = tpu.matmul %7, %8, %cst_7 {dimension_numbers = #tpu.dot_dimension_numbers<[1], [0], [0], [1], [0, 0, 1, 1], [], []>} : vector<32x32xbf16>, vector<32x8xbf16>, vector<32x8xf32> -> vector<32x8xf32>
    %c0_8 = arith.constant 0 : index
    %c0_9 = arith.constant 0 : index
    %10 = vector.load %arg5[%c0_8, %c0_9] : memref<32x1xf32, #tpu.memory_space<vmem>>, vector<32x1xf32>
    %11 = vector.broadcast %10 : vector<32x1xf32> to vector<32x8xf32>
    %12 = arith.addf %9, %11 : vector<32x8xf32>
    %cst_10 = arith.constant 2.000000e+01 : f32
    %13 = vector.broadcast %cst_10 : f32 to vector<32x8xf32>
    %14 = arith.cmpf ogt, %12, %13 : vector<32x8xf32>
    %cst_11 = arith.constant 2.000000e+01 : f32
    %15 = vector.broadcast %cst_11 : f32 to vector<32x8xf32>
    %16 = arith.minimumf %12, %15 : vector<32x8xf32>
    %17 = math.exp %16 : vector<32x8xf32>
    %18 = math.log1p %17 : vector<32x8xf32>
    %19 = arith.select %14, %12, %18 : vector<32x8xi1>, vector<32x8xf32>
    %c0_12 = arith.constant 0 : index
    %c0_13 = arith.constant 0 : index
    %20 = vector.load %arg6[%c0_12, %c0_13] : memref<8x32xbf16, #tpu.memory_space<vmem>>, vector<8x32xbf16>
    %21 = arith.truncf %19 : vector<32x8xf32> to vector<32x8xbf16>
    %cst_14 = arith.constant dense<0.000000e+00> : vector<8x8xf32>
    %22 = tpu.matmul %20, %21, %cst_14 {dimension_numbers = #tpu.dot_dimension_numbers<[1], [0], [0], [1], [0, 0, 1, 1], [], []>} : vector<8x32xbf16>, vector<32x8xbf16>, vector<8x8xf32> -> vector<8x8xf32>
    %c0_15 = arith.constant 0 : index
    %c0_16 = arith.constant 0 : index
    %23 = vector.load %arg7[%c0_15, %c0_16] : memref<8x1xf32, #tpu.memory_space<vmem>>, vector<8x1xf32>
    %24 = vector.broadcast %23 : vector<8x1xf32> to vector<8x8xf32>
    %25 = arith.addf %22, %24 : vector<8x8xf32>
    %c0_17 = arith.constant 0 : index
    %c0_18 = arith.constant 0 : index
    %26 = vector.load %arg8[%c0_17, %c0_18] : memref<8x8xf32, #tpu.memory_space<vmem>>, vector<8x8xf32>
    tpu.vector_store %arg8[%c0_17, %c0_18], %25 {strides = array<i32>} : memref<8x8xf32, #tpu.memory_space<vmem>>, vector<8x8xf32>,
    return
  }
  func.func @transform_0(%arg0: i32) -> (i32, i32) {
    %c0_i32 = arith.constant 0 : i32
    %c0_i32_0 = arith.constant 0 : i32
    return %c0_i32, %arg0 : i32, i32
  }
  func.func @transform_1(%arg0: i32) -> (i32, i32) {
    %c0_i32 = arith.constant 0 : i32
    %c0_i32_0 = arith.constant 0 : i32
    %c0_i32_1 = arith.constant 0 : i32
    return %c0_i32, %c0_i32_0 : i32, i32
  }
  func.func @transform_2(%arg0: i32) -> (i32, i32) {
    %c0_i32 = arith.constant 0 : i32
    %c0_i32_0 = arith.constant 0 : i32
    %c0_i32_1 = arith.constant 0 : i32
    return %c0_i32, %c0_i32_0 : i32, i32
  }
  func.func @transform_3(%arg0: i32) -> (i32, i32) {
    %c0_i32 = arith.constant 0 : i32
    %c0_i32_0 = arith.constant 0 : i32
    %c0_i32_1 = arith.constant 0 : i32
    return %c0_i32, %c0_i32_0 : i32, i32
  }
  func.func @transform_4(%arg0: i32) -> (i32, i32) {
    %c0_i32 = arith.constant 0 : i32
    %c0_i32_0 = arith.constant 0 : i32
    %c0_i32_1 = arith.constant 0 : i32
    return %c0_i32, %c0_i32_0 : i32, i32
  }
  func.func @transform_5(%arg0: i32) -> (i32, i32) {
    %c0_i32 = arith.constant 0 : i32
    %c0_i32_0 = arith.constant 0 : i32
    %c0_i32_1 = arith.constant 0 : i32
    return %c0_i32, %c0_i32_0 : i32, i32
  }
  func.func @transform_6(%arg0: i32) -> (i32, i32) {
    %c0_i32 = arith.constant 0 : i32
    %c0_i32_0 = arith.constant 0 : i32
    %c0_i32_1 = arith.constant 0 : i32
    return %c0_i32, %c0_i32_0 : i32, i32
  }
  func.func @transform_7(%arg0: i32) -> (i32, i32) {
    %c0_i32 = arith.constant 0 : i32
    %c0_i32_0 = arith.constant 0 : i32
    return %c0_i32, %arg0 : i32, i32
  }
}

</mosaic_0001>

<llo_original>
// kernel: tpu_custom_call.1
$region0: #{tpu_custom_call.1}
  #allocation0 [shape = 'u32[]', space=smem, size = 0x4, offset = 0x4, fixed_abs, tag = 'smem constant byte address 0x4 - core index']
  #allocation1 [shape = 'u32[144,128]{1,0:T(1,128)}', space=vmem, size = 0x12000, scoped, tag = 'internal scratch']
  %s0 = inlined_call_operand.vmem [shape: bf16[32,8], index: 0, kind: input, shape index: {}]
  %s1 = inlined_call_operand.vmem [shape: bf16[32,32], index: 1, kind: input, shape index: {}]
  %s2 = inlined_call_operand.vmem [shape: f32[32,1], index: 2, kind: input, shape index: {}]
  %s3 = inlined_call_operand.vmem [shape: bf16[32,32], index: 3, kind: input, shape index: {}]
  %s4 = inlined_call_operand.vmem [shape: f32[32,1], index: 4, kind: input, shape index: {}]
  %s5 = inlined_call_operand.vmem [shape: bf16[8,32], index: 5, kind: input, shape index: {}]
  %s6 = inlined_call_operand.vmem [shape: f32[8,1], index: 6, kind: input, shape index: {}]
  %s7 = inlined_call_operand.hbm [shape: f32[8,8], index: 7, kind: output, shape index: {}]
  %s8 = sld [smem:[#allocation0]]
  $region38: #{tpu_custom_call.1} parent=0
    _
  %s10 = ssub.s32 1, %s8
  %s11 = scalar_select 0, %s10, %s8
  $region1: #{tpu_custom_call.1} parent=0
    #allocation2 [shape = 'u8[4096]{0}', space=vmem, size = 0x1000, scoped, tag = 'output window, operand 0, single buffered']
    #allocation3 [shape = 's32[1]{0}', space=sflag, size = 0x4, scoped, tag = 'scoped memory for tpu_custom_call.1']
    %12 = vsyncpa [#allocation3], 0
    // Predicated region
    $region2: #{tpu_custom_call.1} parent=1 // pred_check
      _
    $region3: #{tpu_custom_call.1} parent=1 // pred_check_branch
      %14 = sbr.rel (0) target = $region5
    $region4: #{tpu_custom_call.1} parent=1 // pred_region
      _
    $region5: #{tpu_custom_call.1} parent=1 // pred_fallthru
      _
    // Predicated region
    $region6: #{tpu_custom_call.1} parent=1 // pred_check
      _
    $region7: #{tpu_custom_call.1} parent=1 // pred_check_branch
      %16 = sbr.rel (0) target = $region9
    $region8: #{tpu_custom_call.1} parent=1 // pred_region
      _
    $region9: #{tpu_custom_call.1} parent=1 // pred_fallthru
      _
    // Predicated region
    $region10: #{tpu_custom_call.1} parent=1 // pred_check
      _
    $region11: #{tpu_custom_call.1} parent=1 // pred_check_branch
      %18 = sbr.rel (0) target = $region13
    $region12: #{tpu_custom_call.1} parent=1 // pred_region
      _
    $region13: #{tpu_custom_call.1} parent=1 // pred_fallthru
      _
    // Predicated region
    $region14: #{tpu_custom_call.1} parent=1 // pred_check
      _
    $region15: #{tpu_custom_call.1} parent=1 // pred_check_branch
      %20 = sbr.rel (0) target = $region17
    $region16: #{tpu_custom_call.1} parent=1 // pred_region
      _
    $region17: #{tpu_custom_call.1} parent=1 // pred_fallthru
      _
    // Predicated region
    $region18: #{tpu_custom_call.1} parent=1 // pred_check
      _
    $region19: #{tpu_custom_call.1} parent=1 // pred_check_branch
      %22 = sbr.rel (0) target = $region21
    $region20: #{tpu_custom_call.1} parent=1 // pred_region
      _
    $region21: #{tpu_custom_call.1} parent=1 // pred_fallthru
      _
    // Predicated region
    $region22: #{tpu_custom_call.1} parent=1 // pred_check
      _
    $region23: #{tpu_custom_call.1} parent=1 // pred_check_branch
      %24 = sbr.rel (0) target = $region25
    $region24: #{tpu_custom_call.1} parent=1 // pred_region
      _
    $region25: #{tpu_custom_call.1} parent=1 // pred_fallthru
      _
    // Predicated region
    $region26: #{tpu_custom_call.1} parent=1 // pred_check
      _
    $region27: #{tpu_custom_call.1} parent=1 // pred_check_branch
      %26 = sbr.rel (0) target = $region29
    $region28: #{tpu_custom_call.1} parent=1 // pred_region
      _
    $region29: #{tpu_custom_call.1} parent=1 // pred_fallthru
      _
    %v28 = vld [vmem:[%s1] sm:$0xf]
    %v29 = vld [vmem:[%s1 + $0x4] sm:$0xf]
    %v30 = vld [vmem:[%s1 + $0x8] sm:$0xf]
    %v31 = vld [vmem:[%s1 + $0xc] sm:$0xf]
    %v32 = vld [vmem:[%s0] sm:$0xf]
    %v33 = vld [vmem:[%s0 + $0x4] sm:$0xf]
    %v34 = vld [vmem:[%s0 + $0x8] sm:$0xf]
    %v35 = vld [vmem:[%s0 + $0xc] sm:$0xf]
    %v36 = vld [vmem:[%s2] sm:$0xff]
    %v37 = vld [vmem:[%s2 + $0x8] sm:$0xff]
    %v38 = vld [vmem:[%s2 + $0x10] sm:$0xff]
    %v39 = vld [vmem:[%s2 + $0x18] sm:$0xff]
    %41 = vset.pattern.permute.xlu0 0
    %42 = vperm.xlu0 %41, %v36
    %v43 = vpop.permute.xlu0 %42
    %46 = vset.pattern.permute.xlu0 0
    %47 = vperm.xlu0 %46, %v37
    %v48 = vpop.permute.xlu0 %47
    %51 = vset.pattern.permute.xlu0 0
    %52 = vperm.xlu0 %51, %v38
    %v53 = vpop.permute.xlu0 %52
    %56 = vset.pattern.permute.xlu0 0
    %57 = vperm.xlu0 %56, %v39
    %v58 = vpop.permute.xlu0 %57
    %v64 = vunpack.c.l.b16 %v28
    %v65 = vunpack.c.l.b16 %v29
    %v66 = vunpack.c.l.b16 %v30
    %v67 = vunpack.c.l.b16 %v31
    %v68 = vpack.c.b16 %v65, %v64
    %v69 = vpack.c.b16 %v67, %v66
    %v74 = vunpack.c.l.b16 %v32
    %v75 = vunpack.c.l.b16 %v33
    %v76 = vunpack.c.l.b16 %v34
    %v77 = vunpack.c.l.b16 %v35
    %v78 = vpack.c.b16 %v75, %v74
    %v79 = vpack.c.b16 %v77, %v76
    %vm82 = vcmask 261120
    %v84 = vsel %vm82, %v68, 0
    %v87 = vsel %vm82, %v69, 0
    %89 = vmatprep.subr.bf16.mxu0 0
    %90 = vmatpush1.bf16.msra.mxu0 %v78
    %91 = vmatprep.subr.bf16.mxu0 0
    %92 = vmatpush1.bf16.msra.mxu0 %v79
    %93 = vmatprep.subr.bf16.mxu0 0
    %94 = vmatpush1.bf16.msra.mxu0 0
    %95 = vmatprep.subr.bf16.mxu0 0
    %96 = vmatpush1.bf16.msra.mxu0 0
    %97 = vmatprep.subr.bf16.mxu0 0
    %98 = vmatpush1.bf16.msra.mxu0 0
    %99 = vmatprep.subr.bf16.mxu0 0
    %100 = vmatpush1.bf16.msra.mxu0 0
    %101 = vmatprep.subr.bf16.mxu0 0
    %102 = vmatpush1.bf16.msra.mxu0 0
    %103 = vmatprep.subr.bf16.mxu0 0
    %104 = vmatpush1.bf16.msra.mxu0 0
    %105 = vmatprep.subr.bf16.mxu0 0
    %106 = vmatpush1.bf16.msra.mxu0 0
    %107 = vmatprep.subr.bf16.mxu0 0
    %108 = vmatpush1.bf16.msra.mxu0 0
    %109 = vmatprep.subr.bf16.mxu0 0
    %110 = vmatpush1.bf16.msra.mxu0 0
    %111 = vmatprep.subr.bf16.mxu0 0
    %112 = vmatpush1.bf16.msra.mxu0 0
    %113 = vmatprep.subr.bf16.mxu0 0
    %114 = vmatpush1.bf16.msra.mxu0 0
    %115 = vmatprep.subr.bf16.mxu0 0
    %116 = vmatpush1.bf16.msra.mxu0 0
    %117 = vmatprep.subr.bf16.mxu0 0
    %118 = vmatpush1.bf16.msra.mxu0 0
    %119 = vmatprep.subr.bf16.mxu0 0
    %120 = vmatpush1.bf16.msra.mxu0 0
    %121 = vmatprep.mubr.bf16.mxu0 0
    %122 = vmatmul.mubr.bf16.gmra.mrb[0].mxu0 %v84
    %v123 = vpop.f32.mrb[0].mxu0
    %v124 = vadd.f32 %v43, %v123
    %v125 = vpop.f32.mrb[0].mxu0
    %v126 = vpop.f32.mrb[0].mxu0
    %v127 = vadd.f32 %v48, %v126
    %v128 = vpop.f32.mrb[0].mxu0
    %129 = vmatprep.mubr.bf16.mxu0 0
    %130 = vmatmul.mubr.bf16.gmra.mrb[0].mxu0 %v87
    %v131 = vpop.f32.mrb[0].mxu0
    %v132 = vadd.f32 %v53, %v131
    %v133 = vpop.f32.mrb[0].mxu0
    %v134 = vpop.f32.mrb[0].mxu0
    %v135 = vadd.f32 %v58, %v134
    %v136 = vpop.f32.mrb[0].mxu0
    %137 = vdwg.mxu0
    %v138 = vand.u32 2147483647, %v124
    %vm139 = vcmp.le.f32.partialorder %v138, 0.7853982
    %vm140 = vcmp.lt.s32.totalorder %v124, 0
    %v141 = vand.u32 %v124, 2139095040
    %v142 = vshrl.u32 %v141, 23
    %v143 = vsub.s32 %v142, 127
    %v144 = vand.u32 2147483647, %v124
    %v145 = vand.u32 %v144, 8388607
    %v146 = vor.u32 %v145, 8388608
    %v147 = vsub.s32 0, %v146
    %v148 = vadd.s32 %v143, 1
    %vm149 = vcmp.gt.s32.totalorder %v148, 0
    %v150 = vsel %vm149, %v148, 0
    %v151 = vshrl.u32 %v150, 5
    %v152 = vand.u32 %v150, 31
    %v153 = vsub.s32 32, %v152
    %v154 = vshrl.u32 683565275, %v153
    %v155 = vshll.u32 683565275, %v152
    %v156 = vshrl.u32 2475754826, %v153
    %v157 = vor.u32 %v155, %v156
    %v158 = vshll.u32 2475754826, %v152
    %v159 = vshrl.u32 2131351028, %v153
    %v160 = vor.u32 %v158, %v159
    %v161 = vshll.u32 2131351028, %v152
    %v162 = vshrl.u32 2102212464, %v153
    %v163 = vor.u32 %v161, %v162
    %v164 = vshll.u32 2102212464, %v152
    %v165 = vshrl.u32 920167782, %v153
    %v166 = vor.u32 %v164, %v165
    %v167 = vshll.u32 920167782, %v152
    %v168 = vshrl.u32 1326507024, %v153
    %v169 = vor.u32 %v167, %v168
    %vm170 = vcmp.lt.s32.totalorder %v151, 1
    %vm171 = vcmp.lt.s32.totalorder %v151, 2
    %vm172 = vcmp.lt.s32.totalorder %v151, 3
    %vm173 = vcmp.lt.s32.totalorder %v151, 4
    %v174 = vsel %vm170, %v154, %v157
    %v175 = vsel %vm173, %v163, 2102212464
    %v176 = vsel %vm172, %v160, %v175
    %v177 = vsel %vm171, %v174, %v176
    %v178 = vsel %vm170, %v157, %v160
    %v179 = vsel %vm173, %v166, 920167782
    %v180 = vsel %vm172, %v163, %v179
    %v181 = vsel %vm171, %v178, %v180
    %v182 = vsel %vm170, %v160, %v163
    %v183 = vsel %vm173, %v169, 1326507024
    %v184 = vsel %vm172, %v166, %v183
    %v185 = vsel %vm171, %v182, %v184
    %v186 = vshll.u32 %v146, 8
    %v187 = vmul.u32.u64.compose %v186, %v185
    %v188 = vextract.low.u32 %v187
    %v189 = vextract.high.u32 %v187
    %v190 = vmul.u32.u64.compose %v186, %v181
    %v191 = vextract.low.u32 %v190
    %v192 = vextract.high.u32 %v190
    %v193 = vmul.u32 %v186, %v177
    %v194 = vadd.s32 %v189, %v191
    %vm195 = vc.u32 %v189, %v191
    %v196 = vadd.s32 %v192, 1
    %v197 = vsel %vm195, %v196, %v192
    %v198 = vadd.s32 %v193, %v197
    %v199 = vadd.s32 %v198, 536870912
    %v200 = vshrl.u32 %v199, 30
    %v201 = vshll.u32 %v200, 30
    %v202 = vsub.s32 %v198, %v201
    %vm203 = vcmp.lt.s32.totalorder %v202, 0
    %v204 = vsub.s32 0, %v202
    %v205 = vsel %vm203, %v204, %v202
    %v206 = vclz %v205
    %v207 = vsub.s32 %v206, 2
    %vm208 = vcmp.gt.s32.totalorder 0, %v207
    %v209 = vsel %vm208, 0, %v207
    %v210 = vsub.s32 32, %v209
    %v211 = vshll.u32 %v202, %v209
    %v212 = vshrl.u32 %v194, %v210
    %v213 = vor.u32 %v211, %v212
    %v214 = vsub.s32 4294967266, %v209
    %v215 = vadd.s32 %v214, 127
    %v216 = vshll.u32 %v215, 23
    %v217 = vor.u32 4788187, %v216
    %v218 = vand.u32 2147483647, %v217
    %v220 = vcvt.s32.f32 %v213
    %v221 = vmul.f32 %v220, %v218
    %v222 = vxor.u32 %v221, 2147483648
    %v223 = vsel %vm140, %v222, %v221
    %v224 = vsub.s32 4, %v200
    %v225 = vsel %vm140, %v224, %v200
    %v226 = vsel %vm139, %v124, %v223
    %v227 = vsel %vm139, 0, %v225
    %v228 = vcosq.f32.pop %v226
    %v229 = vsinq.f32.pop %v226
    %vm230 = vweird.f32 %v124
    %v231 = vadd.s32 %v227, 3
    %v232 = vand.u32 %v231, 3
    %vm233 = vcmp.lt.s32.totalorder %v232, 2
    %vm234 = vcmp.eq.s32.totalorder %v232, 0
    %v235 = vxor.u32 %v229, 2147483648
    %v236 = vsel %vm234, %v228, %v235
    %vm237 = vcmp.eq.s32.totalorder %v232, 2
    %v238 = vxor.u32 %v228, 2147483648
    %v239 = vsel %vm237, %v238, %v229
    %v240 = vsel %vm233, %v236, %v239
    %v241 = vsel %vm230, nan, %v240
    %v242 = vand.u32 2147483647, %v127
    %vm243 = vcmp.le.f32.partialorder %v242, 0.7853982
    %vm244 = vcmp.lt.s32.totalorder %v127, 0
    %v245 = vand.u32 %v127, 2139095040
    %v246 = vshrl.u32 %v245, 23
    %v247 = vsub.s32 %v246, 127
    %v248 = vand.u32 2147483647, %v127
    %v249 = vand.u32 %v248, 8388607
    %v250 = vor.u32 %v249, 8388608
    %v251 = vsub.s32 0, %v250
    %v252 = vadd.s32 %v247, 1
    %vm253 = vcmp.gt.s32.totalorder %v252, 0
    %v254 = vsel %vm253, %v252, 0
    %v255 = vshrl.u32 %v254, 5
    %v256 = vand.u32 %v254, 31
    %v257 = vsub.s32 32, %v256
    %v258 = vshrl.u32 683565275, %v257
    %v259 = vshll.u32 683565275, %v256
    %v260 = vshrl.u32 2475754826, %v257
    %v261 = vor.u32 %v259, %v260
    %v262 = vshll.u32 2475754826, %v256
    %v263 = vshrl.u32 2131351028, %v257
    %v264 = vor.u32 %v262, %v263
    %v265 = vshll.u32 2131351028, %v256
    %v266 = vshrl.u32 2102212464, %v257
    %v267 = vor.u32 %v265, %v266
    %v268 = vshll.u32 2102212464, %v256
    %v269 = vshrl.u32 920167782, %v257
    %v270 = vor.u32 %v268, %v269
    %v271 = vshll.u32 920167782, %v256
    %v272 = vshrl.u32 1326507024, %v257
    %v273 = vor.u32 %v271, %v272
    %vm274 = vcmp.lt.s32.totalorder %v255, 1
    %vm275 = vcmp.lt.s32.totalorder %v255, 2
    %vm276 = vcmp.lt.s32.totalorder %v255, 3
    %vm277 = vcmp.lt.s32.totalorder %v255, 4
    %v278 = vsel %vm274, %v258, %v261
    %v279 = vsel %vm277, %v267, 2102212464
    %v280 = vsel %vm276, %v264, %v279
    %v281 = vsel %vm275, %v278, %v280
    %v282 = vsel %vm274, %v261, %v264
    %v283 = vsel %vm277, %v270, 920167782
    %v284 = vsel %vm276, %v267, %v283
    %v285 = vsel %vm275, %v282, %v284
    %v286 = vsel %vm274, %v264, %v267
    %v287 = vsel %vm277, %v273, 1326507024
    %v288 = vsel %vm276, %v270, %v287
    %v289 = vsel %vm275, %v286, %v288
    %v290 = vshll.u32 %v250, 8
    %v291 = vmul.u32.u64.compose %v290, %v289
    %v292 = vextract.low.u32 %v291
    %v293 = vextract.high.u32 %v291
    %v294 = vmul.u32.u64.compose %v290, %v285
    %v295 = vextract.low.u32 %v294
    %v296 = vextract.high.u32 %v294
    %v297 = vmul.u32 %v290, %v281
    %v298 = vadd.s32 %v293, %v295
    %vm299 = vc.u32 %v293, %v295
    %v300 = vadd.s32 %v296, 1
    %v301 = vsel %vm299, %v300, %v296
    %v302 = vadd.s32 %v297, %v301
    %v303 = vadd.s32 %v302, 536870912
    %v304 = vshrl.u32 %v303, 30
    %v305 = vshll.u32 %v304, 30
    %v306 = vsub.s32 %v302, %v305
    %vm307 = vcmp.lt.s32.totalorder %v306, 0
    %v308 = vsub.s32 0, %v306
    %v309 = vsel %vm307, %v308, %v306
    %v310 = vclz %v309
    %v311 = vsub.s32 %v310, 2
    %vm312 = vcmp.gt.s32.totalorder 0, %v311
    %v313 = vsel %vm312, 0, %v311
    %v314 = vsub.s32 32, %v313
    %v315 = vshll.u32 %v306, %v313
    %v316 = vshrl.u32 %v298, %v314
    %v317 = vor.u32 %v315, %v316
    %v318 = vsub.s32 4294967266, %v313
    %v319 = vadd.s32 %v318, 127
    %v320 = vshll.u32 %v319, 23
    %v321 = vor.u32 4788187, %v320
    %v322 = vand.u32 2147483647, %v321
    %v324 = vcvt.s32.f32 %v317
    %v325 = vmul.f32 %v324, %v322
    %v326 = vxor.u32 %v325, 2147483648
    %v327 = vsel %vm244, %v326, %v325
    %v328 = vsub.s32 4, %v304
    %v329 = vsel %vm244, %v328, %v304
    %v330 = vsel %vm243, %v127, %v327
    %v331 = vsel %vm243, 0, %v329
    %v332 = vcosq.f32.pop %v330
    %v333 = vsinq.f32.pop %v330
    %vm334 = vweird.f32 %v127
    %v335 = vadd.s32 %v331, 3
    %v336 = vand.u32 %v335, 3
    %vm337 = vcmp.lt.s32.totalorder %v336, 2
    %vm338 = vcmp.eq.s32.totalorder %v336, 0
    %v339 = vxor.u32 %v333, 2147483648
    %v340 = vsel %vm338, %v332, %v339
    %vm341 = vcmp.eq.s32.totalorder %v336, 2
    %v342 = vxor.u32 %v332, 2147483648
    %v343 = vsel %vm341, %v342, %v333
    %v344 = vsel %vm337, %v340, %v343
    %v345 = vsel %vm334, nan, %v344
    %v346 = vand.u32 2147483647, %v132
    %vm347 = vcmp.le.f32.partialorder %v346, 0.7853982
    %vm348 = vcmp.lt.s32.totalorder %v132, 0
    %v349 = vand.u32 %v132, 2139095040
    %v350 = vshrl.u32 %v349, 23
    %v351 = vsub.s32 %v350, 127
    %v352 = vand.u32 2147483647, %v132
    %v353 = vand.u32 %v352, 8388607
    %v354 = vor.u32 %v353, 8388608
    %v355 = vsub.s32 0, %v354
    %v356 = vadd.s32 %v351, 1
    %vm357 = vcmp.gt.s32.totalorder %v356, 0
    %v358 = vsel %vm357, %v356, 0
    %v359 = vshrl.u32 %v358, 5
    %v360 = vand.u32 %v358, 31
    %v361 = vsub.s32 32, %v360
    %v362 = vshrl.u32 683565275, %v361
    %v363 = vshll.u32 683565275, %v360
    %v364 = vshrl.u32 2475754826, %v361
    %v365 = vor.u32 %v363, %v364
    %v366 = vshll.u32 2475754826, %v360
    %v367 = vshrl.u32 2131351028, %v361
    %v368 = vor.u32 %v366, %v367
    %v369 = vshll.u32 2131351028, %v360
    %v370 = vshrl.u32 2102212464, %v361
    %v371 = vor.u32 %v369, %v370
    %v372 = vshll.u32 2102212464, %v360
    %v373 = vshrl.u32 920167782, %v361
    %v374 = vor.u32 %v372, %v373
    %v375 = vshll.u32 920167782, %v360
    %v376 = vshrl.u32 1326507024, %v361
    %v377 = vor.u32 %v375, %v376
    %vm378 = vcmp.lt.s32.totalorder %v359, 1
    %vm379 = vcmp.lt.s32.totalorder %v359, 2
    %vm380 = vcmp.lt.s32.totalorder %v359, 3
    %vm381 = vcmp.lt.s32.totalorder %v359, 4
    %v382 = vsel %vm378, %v362, %v365
    %v383 = vsel %vm381, %v371, 2102212464
    %v384 = vsel %vm380, %v368, %v383
    %v385 = vsel %vm379, %v382, %v384
    %v386 = vsel %vm378, %v365, %v368
    %v387 = vsel %vm381, %v374, 920167782
    %v388 = vsel %vm380, %v371, %v387
    %v389 = vsel %vm379, %v386, %v388
    %v390 = vsel %vm378, %v368, %v371
    %v391 = vsel %vm381, %v377, 1326507024
    %v392 = vsel %vm380, %v374, %v391
    %v393 = vsel %vm379, %v390, %v392
    %v394 = vshll.u32 %v354, 8
    %v395 = vmul.u32.u64.compose %v394, %v393
    %v396 = vextract.low.u32 %v395
    %v397 = vextract.high.u32 %v395
    %v398 = vmul.u32.u64.compose %v394, %v389
    %v399 = vextract.low.u32 %v398
    %v400 = vextract.high.u32 %v398
    %v401 = vmul.u32 %v394, %v385
    %v402 = vadd.s32 %v397, %v399
    %vm403 = vc.u32 %v397, %v399
    %v404 = vadd.s32 %v400, 1
    %v405 = vsel %vm403, %v404, %v400
    %v406 = vadd.s32 %v401, %v405
    %v407 = vadd.s32 %v406, 536870912
    %v408 = vshrl.u32 %v407, 30
    %v409 = vshll.u32 %v408, 30
    %v410 = vsub.s32 %v406, %v409
    %vm411 = vcmp.lt.s32.totalorder %v410, 0
    %v412 = vsub.s32 0, %v410
    %v413 = vsel %vm411, %v412, %v410
    %v414 = vclz %v413
    %v415 = vsub.s32 %v414, 2
    %vm416 = vcmp.gt.s32.totalorder 0, %v415
    %v417 = vsel %vm416, 0, %v415
    %v418 = vsub.s32 32, %v417
    %v419 = vshll.u32 %v410, %v417
    %v420 = vshrl.u32 %v402, %v418
    %v421 = vor.u32 %v419, %v420
    %v422 = vsub.s32 4294967266, %v417
    %v423 = vadd.s32 %v422, 127
    %v424 = vshll.u32 %v423, 23
    %v425 = vor.u32 4788187, %v424
    %v426 = vand.u32 2147483647, %v425
    %v428 = vcvt.s32.f32 %v421
    %v429 = vmul.f32 %v428, %v426
    %v430 = vxor.u32 %v429, 2147483648
    %v431 = vsel %vm348, %v430, %v429
    %v432 = vsub.s32 4, %v408
    %v433 = vsel %vm348, %v432, %v408
    %v434 = vsel %vm347, %v132, %v431
    %v435 = vsel %vm347, 0, %v433
    %v436 = vcosq.f32.pop %v434
    %v437 = vsinq.f32.pop %v434
    %vm438 = vweird.f32 %v132
    %v439 = vadd.s32 %v435, 3
    %v440 = vand.u32 %v439, 3
    %vm441 = vcmp.lt.s32.totalorder %v440, 2
    %vm442 = vcmp.eq.s32.totalorder %v440, 0
    %v443 = vxor.u32 %v437, 2147483648
    %v444 = vsel %vm442, %v436, %v443
    %vm445 = vcmp.eq.s32.totalorder %v440, 2
    %v446 = vxor.u32 %v436, 2147483648
    %v447 = vsel %vm445, %v446, %v437
    %v448 = vsel %vm441, %v444, %v447
    %v449 = vsel %vm438, nan, %v448
    %v450 = vand.u32 2147483647, %v135
    %vm451 = vcmp.le.f32.partialorder %v450, 0.7853982
    %vm452 = vcmp.lt.s32.totalorder %v135, 0
    %v453 = vand.u32 %v135, 2139095040
    %v454 = vshrl.u32 %v453, 23
    %v455 = vsub.s32 %v454, 127
    %v456 = vand.u32 2147483647, %v135
    %v457 = vand.u32 %v456, 8388607
    %v458 = vor.u32 %v457, 8388608
    %v459 = vsub.s32 0, %v458
    %v460 = vadd.s32 %v455, 1
    %vm461 = vcmp.gt.s32.totalorder %v460, 0
    %v462 = vsel %vm461, %v460, 0
    %v463 = vshrl.u32 %v462, 5
    %v464 = vand.u32 %v462, 31
    %v465 = vsub.s32 32, %v464
    %v466 = vshrl.u32 683565275, %v465
    %v467 = vshll.u32 683565275, %v464
    %v468 = vshrl.u32 2475754826, %v465
    %v469 = vor.u32 %v467, %v468
    %v470 = vshll.u32 2475754826, %v464
    %v471 = vshrl.u32 2131351028, %v465
    %v472 = vor.u32 %v470, %v471
    %v473 = vshll.u32 2131351028, %v464
    %v474 = vshrl.u32 2102212464, %v465
    %v475 = vor.u32 %v473, %v474
    %v476 = vshll.u32 2102212464, %v464
    %v477 = vshrl.u32 920167782, %v465
    %v478 = vor.u32 %v476, %v477
    %v479 = vshll.u32 920167782, %v464
    %v480 = vshrl.u32 1326507024, %v465
    %v481 = vor.u32 %v479, %v480
    %vm482 = vcmp.lt.s32.totalorder %v463, 1
    %vm483 = vcmp.lt.s32.totalorder %v463, 2
    %vm484 = vcmp.lt.s32.totalorder %v463, 3
    %vm485 = vcmp.lt.s32.totalorder %v463, 4
    %v486 = vsel %vm482, %v466, %v469
    %v487 = vsel %vm485, %v475, 2102212464
    %v488 = vsel %vm484, %v472, %v487
    %v489 = vsel %vm483, %v486, %v488
    %v490 = vsel %vm482, %v469, %v472
    %v491 = vsel %vm485, %v478, 920167782
    %v492 = vsel %vm484, %v475, %v491
    %v493 = vsel %vm483, %v490, %v492
    %v494 = vsel %vm482, %v472, %v475
    %v495 = vsel %vm485, %v481, 1326507024
    %v496 = vsel %vm484, %v478, %v495
    %v497 = vsel %vm483, %v494, %v496
    %v498 = vshll.u32 %v458, 8
    %v499 = vmul.u32.u64.compose %v498, %v497
    %v500 = vextract.low.u32 %v499
    %v501 = vextract.high.u32 %v499
    %v502 = vmul.u32.u64.compose %v498, %v493
    %v503 = vextract.low.u32 %v502
    %v504 = vextract.high.u32 %v502
    %v505 = vmul.u32 %v498, %v489
    %v506 = vadd.s32 %v501, %v503
    %vm507 = vc.u32 %v501, %v503
    %v508 = vadd.s32 %v504, 1
    %v509 = vsel %vm507, %v508, %v504
    %v510 = vadd.s32 %v505, %v509
    %v511 = vadd.s32 %v510, 536870912
    %v512 = vshrl.u32 %v511, 30
    %v513 = vshll.u32 %v512, 30
    %v514 = vsub.s32 %v510, %v513
    %vm515 = vcmp.lt.s32.totalorder %v514, 0
    %v516 = vsub.s32 0, %v514
    %v517 = vsel %vm515, %v516, %v514
    %v518 = vclz %v517
    %v519 = vsub.s32 %v518, 2
    %vm520 = vcmp.gt.s32.totalorder 0, %v519
    %v521 = vsel %vm520, 0, %v519
    %v522 = vsub.s32 32, %v521
    %v523 = vshll.u32 %v514, %v521
    %v524 = vshrl.u32 %v506, %v522
    %v525 = vor.u32 %v523, %v524
    %v526 = vsub.s32 4294967266, %v521
    %v527 = vadd.s32 %v526, 127
    %v528 = vshll.u32 %v527, 23
    %v529 = vor.u32 4788187, %v528
    %v530 = vand.u32 2147483647, %v529
    %v532 = vcvt.s32.f32 %v525
    %v533 = vmul.f32 %v532, %v530
    %v534 = vxor.u32 %v533, 2147483648
    %v535 = vsel %vm452, %v534, %v533
    %v536 = vsub.s32 4, %v512
    %v537 = vsel %vm452, %v536, %v512
    %v538 = vsel %vm451, %v135, %v535
    %v539 = vsel %vm451, 0, %v537
    %v540 = vcosq.f32.pop %v538
    %v541 = vsinq.f32.pop %v538
    %vm542 = vweird.f32 %v135
    %v543 = vadd.s32 %v539, 3
    %v544 = vand.u32 %v543, 3
    %vm545 = vcmp.lt.s32.totalorder %v544, 2
    %vm546 = vcmp.eq.s32.totalorder %v544, 0
    %v547 = vxor.u32 %v541, 2147483648
    %v548 = vsel %vm546, %v540, %v547
    %vm549 = vcmp.eq.s32.totalorder %v544, 2
    %v550 = vxor.u32 %v540, 2147483648
    %v551 = vsel %vm549, %v550, %v541
    %v552 = vsel %vm545, %v548, %v551
    %v553 = vsel %vm542, nan, %v552
    %v554 = vld [vmem:[%s3] sm:$0xf]
    %v555 = vld [vmem:[%s3 + $0x4] sm:$0xf]
    %v556 = vld [vmem:[%s3 + $0x8] sm:$0xf]
    %v557 = vld [vmem:[%s3 + $0xc] sm:$0xf]
    %v558 = vpack.c.bf16 %v345, %v241
    %v559 = vpack.c.bf16 %v553, %v449
    %v560 = vld [vmem:[%s4] sm:$0xff]
    %v561 = vld [vmem:[%s4 + $0x8] sm:$0xff]
    %v562 = vld [vmem:[%s4 + $0x10] sm:$0xff]
    %v563 = vld [vmem:[%s4 + $0x18] sm:$0xff]
    %565 = vset.pattern.permute.xlu0 0
    %566 = vperm.xlu0 %565, %v560
    %v567 = vpop.permute.xlu0 %566
    %570 = vset.pattern.permute.xlu0 0
    %571 = vperm.xlu0 %570, %v561
    %v572 = vpop.permute.xlu0 %571
    %575 = vset.pattern.permute.xlu0 0
    %576 = vperm.xlu0 %575, %v562
    %v577 = vpop.permute.xlu0 %576
    %580 = vset.pattern.permute.xlu0 0
    %581 = vperm.xlu0 %580, %v563
    %v582 = vpop.permute.xlu0 %581
    %v588 = vunpack.c.l.b16 %v554
    %v589 = vunpack.c.l.b16 %v555
    %v590 = vunpack.c.l.b16 %v556
    %v591 = vunpack.c.l.b16 %v557
    %v592 = vpack.c.b16 %v589, %v588
    %v593 = vpack.c.b16 %v591, %v590
    %v595 = vsel %vm82, %v592, 0
    %v598 = vsel %vm82, %v593, 0
    %600 = vmatprep.subr.bf16.mxu0 0
    %601 = vmatpush1.bf16.msra.mxu0 %v558
    %602 = vmatprep.subr.bf16.mxu0 0
    %603 = vmatpush1.bf16.msra.mxu0 %v559
    %604 = vmatprep.subr.bf16.mxu0 0
    %605 = vmatpush1.bf16.msra.mxu0 0
    %606 = vmatprep.subr.bf16.mxu0 0
    %607 = vmatpush1.bf16.msra.mxu0 0
    %608 = vmatprep.subr.bf16.mxu0 0
    %609 = vmatpush1.bf16.msra.mxu0 0
    %610 = vmatprep.subr.bf16.mxu0 0
    %611 = vmatpush1.bf16.msra.mxu0 0
    %612 = vmatprep.subr.bf16.mxu0 0
    %613 = vmatpush1.bf16.msra.mxu0 0
    %614 = vmatprep.subr.bf16.mxu0 0
    %615 = vmatpush1.bf16.msra.mxu0 0
    %616 = vmatprep.subr.bf16.mxu0 0
    %617 = vmatpush1.bf16.msra.mxu0 0
    %618 = vmatprep.subr.bf16.mxu0 0
    %619 = vmatpush1.bf16.msra.mxu0 0
    %620 = vmatprep.subr.bf16.mxu0 0
    %621 = vmatpush1.bf16.msra.mxu0 0
    %622 = vmatprep.subr.bf16.mxu0 0
    %623 = vmatpush1.bf16.msra.mxu0 0
    %624 = vmatprep.subr.bf16.mxu0 0
    %625 = vmatpush1.bf16.msra.mxu0 0
    %626 = vmatprep.subr.bf16.mxu0 0
    %627 = vmatpush1.bf16.msra.mxu0 0
    %628 = vmatprep.subr.bf16.mxu0 0
    %629 = vmatpush1.bf16.msra.mxu0 0
    %630 = vmatprep.subr.bf16.mxu0 0
    %631 = vmatpush1.bf16.msra.mxu0 0
    %632 = vmatprep.mubr.bf16.mxu0 0
    %633 = vmatmul.mubr.bf16.gmra.mrb[0].mxu0 %v595
    %v634 = vpop.f32.mrb[0].mxu0
    %v635 = vadd.f32 %v567, %v634
    %v636 = vpop.f32.mrb[0].mxu0
    %v637 = vpop.f32.mrb[0].mxu0
    %v638 = vadd.f32 %v572, %v637
    %v639 = vpop.f32.mrb[0].mxu0
    %640 = vmatprep.mubr.bf16.mxu0 0
    %641 = vmatmul.mubr.bf16.gmra.mrb[0].mxu0 %v598
    %v642 = vpop.f32.mrb[0].mxu0
    %v643 = vadd.f32 %v577, %v642
    %v644 = vpop.f32.mrb[0].mxu0
    %v645 = vpop.f32.mrb[0].mxu0
    %v646 = vadd.f32 %v582, %v645
    %v647 = vpop.f32.mrb[0].mxu0
    %648 = vdwg.mxu0
    %vm649 = vcmp.gt.f32.partialorder %v635, 20.0
    %vm650 = vcmp.gt.f32.partialorder %v638, 20.0
    %vm651 = vcmp.gt.f32.partialorder %v643, 20.0
    %vm652 = vcmp.gt.f32.partialorder %v646, 20.0
    %v653 = vmin.f32 %v635, 20.0
    %v654 = vmin.f32 %v638, 20.0
    %v655 = vmin.f32 %v643, 20.0
    %v656 = vmin.f32 %v646, 20.0
    %v657 = vmul.f32 %v653, 1.442695
    %v658 = vpow.pop %v657
    %v659 = vmul.f32 %v654, 1.442695
    %v660 = vpow.pop %v659
    %v661 = vmul.f32 %v655, 1.442695
    %v662 = vpow.pop %v661
    %v663 = vmul.f32 %v656, 1.442695
    %v664 = vpow.pop %v663
    %v665 = vadd.f32 %v658, 1.0
    %v666 = vlog2.pop %v665
    %v667 = vmul.f32 %v666, 0.6931472
    %v668 = vmul.f32 -0.5, %v658
    %v669 = vadd.f32 %v668, 1.0
    %v670 = vmul.f32 %v669, %v658
    %v671 = vand.u32 2147483647, %v658
    %vm672 = vcmp.lt.f32.partialorder %v671, 0.0004427343
    %v673 = vsel %vm672, %v670, %v667
    %v674 = vadd.f32 %v660, 1.0
    %v675 = vlog2.pop %v674
    %v676 = vmul.f32 %v675, 0.6931472
    %v677 = vmul.f32 -0.5, %v660
    %v678 = vadd.f32 %v677, 1.0
    %v679 = vmul.f32 %v678, %v660
    %v680 = vand.u32 2147483647, %v660
    %vm681 = vcmp.lt.f32.partialorder %v680, 0.0004427343
    %v682 = vsel %vm681, %v679, %v676
    %v683 = vadd.f32 %v662, 1.0
    %v684 = vlog2.pop %v683
    %v685 = vmul.f32 %v684, 0.6931472
    %v686 = vmul.f32 -0.5, %v662
    %v687 = vadd.f32 %v686, 1.0
    %v688 = vmul.f32 %v687, %v662
    %v689 = vand.u32 2147483647, %v662
    %vm690 = vcmp.lt.f32.partialorder %v689, 0.0004427343
    %v691 = vsel %vm690, %v688, %v685
    %v692 = vadd.f32 %v664, 1.0
    %v693 = vlog2.pop %v692
    %v694 = vmul.f32 %v693, 0.6931472
    %v695 = vmul.f32 -0.5, %v664
    %v696 = vadd.f32 %v695, 1.0
    %v697 = vmul.f32 %v696, %v664
    %v698 = vand.u32 2147483647, %v664
    %vm699 = vcmp.lt.f32.partialorder %v698, 0.0004427343
    %v700 = vsel %vm699, %v697, %v694
    %v701 = vsel %vm649, %v635, %v673
    %v702 = vsel %vm650, %v638, %v682
    %v703 = vsel %vm651, %v643, %v691
    %v704 = vsel %vm652, %v646, %v700
    %v705 = vld [vmem:[%s5] sm:$0xf]
    %v706 = vpack.c.bf16 %v702, %v701
    %v707 = vpack.c.bf16 %v704, %v703
    %v708 = vld [vmem:[%s6] sm:$0xff]
    %710 = vset.pattern.permute.xlu0 0
    %711 = vperm.xlu0 %710, %v708
    %v712 = vpop.permute.xlu0 %711
    %v715 = vsel %vm82, %v705, 0
    %717 = vmatprep.subr.bf16.mxu0 0
    %718 = vmatpush1.bf16.msra.mxu0 %v706
    %719 = vmatprep.subr.bf16.mxu0 0
    %720 = vmatpush1.bf16.msra.mxu0 %v707
    %721 = vmatprep.subr.bf16.mxu0 0
    %722 = vmatpush1.bf16.msra.mxu0 0
    %723 = vmatprep.subr.bf16.mxu0 0
    %724 = vmatpush1.bf16.msra.mxu0 0
    %725 = vmatprep.subr.bf16.mxu0 0
    %726 = vmatpush1.bf16.msra.mxu0 0
    %727 = vmatprep.subr.bf16.mxu0 0
    %728 = vmatpush1.bf16.msra.mxu0 0
    %729 = vmatprep.subr.bf16.mxu0 0
    %730 = vmatpush1.bf16.msra.mxu0 0
    %731 = vmatprep.subr.bf16.mxu0 0
    %732 = vmatpush1.bf16.msra.mxu0 0
    %733 = vmatprep.subr.bf16.mxu0 0
    %734 = vmatpush1.bf16.msra.mxu0 0
    %735 = vmatprep.subr.bf16.mxu0 0
    %736 = vmatpush1.bf16.msra.mxu0 0
    %737 = vmatprep.subr.bf16.mxu0 0
    %738 = vmatpush1.bf16.msra.mxu0 0
    %739 = vmatprep.subr.bf16.mxu0 0
    %740 = vmatpush1.bf16.msra.mxu0 0
    %741 = vmatprep.subr.bf16.mxu0 0
    %742 = vmatpush1.bf16.msra.mxu0 0
    %743 = vmatprep.subr.bf16.mxu0 0
    %744 = vmatpush1.bf16.msra.mxu0 0
    %745 = vmatprep.subr.bf16.mxu0 0
    %746 = vmatpush1.bf16.msra.mxu0 0
    %747 = vmatprep.subr.bf16.mxu0 0
    %748 = vmatpush1.bf16.msra.mxu0 0
    %749 = vmatprep.mubr.bf16.mxu0 0
    %750 = vmatmul.mubr.bf16.gmra.mrb[0].mxu0 %v715
    %v751 = vpop.f32.mrb[0].mxu0
    %v752 = vadd.f32 %v712, %v751
    %v753 = vpop.f32.mrb[0].mxu0
    %v754 = vpop.f32.mrb[0].mxu0
    %v755 = vpop.f32.mrb[0].mxu0
    %756 = vdwg.mxu0
    %vm757 = vcmask 64512
    %758 = vst.msk [vmem:[#allocation2] sm:$0xff] %vm757, %v752
    // Predicated region
    $region30: #{tpu_custom_call.1} parent=1 // pred_check
      _
    $region31: #{tpu_custom_call.1} parent=1 // pred_check_branch
      %760 = sbr.rel (0) target = $region33
    $region32: #{tpu_custom_call.1} parent=1 // pred_region
      %s762 = ssub.s32 128, 128
      %763 = vsyncadd [#allocation3], %s762
      %s765 = sshll.u32 [#allocation2], 4
      %s766 = int_to_ptr.vmem [resolvable:$true] %s765
      %768 = dma.vmem_to_hbm [thread:$0]  %s766, 128, %s7, [#allocation3]
    $region33: #{tpu_custom_call.1} parent=1 // pred_fallthru
      _
    // Predicated region
    $region34: #{tpu_custom_call.1} parent=1 // pred_check
      _
    $region35: #{tpu_custom_call.1} parent=1 // pred_check_branch
      %770 = sbr.rel (0) target = $region37
    $region36: #{tpu_custom_call.1} parent=1 // pred_region
      %771 = dma.done [#allocation3], 128
    $region37: #{tpu_custom_call.1} parent=1 // pred_fallthru
      _
    %772 = vsyncpa [#allocation3], 1

</llo_original>
